<compile_context>
chip_gen: v7x
topology: tpu7x:2x2x1
jax: 0.10.0
libtpu: 0.0.40
codegen_flags: <defaults>
</compile_context>

<pallas_src>
import jax
import jax.numpy as jnp
from jax.experimental import pallas as pl
from jax.experimental.pallas import tpu as pltpu

# ----- hyper-params consistent with ConvPolicySACD at small test scale ------
WINDOW_LEN   = 16          # input_shape[0]
N_FEATS      = 4           # input_shape[1]
N_ASSETS     = 4           # output_shape[0]
ACTION_ATOMS = 3           # output_shape[1]
D_MODEL      = 32          # module default is 512; small value for the demo
CHANNELS     = (32, 32)
KERNELS      = (5, 5)
STRIDES      = (1, 1)

assert WINDOW_LEN >= sum(KERNELS), "window_len must be >= sum of kernels"
L1 = (WINDOW_LEN - KERNELS[0]) // STRIDES[0] + 1   # 12
L2 = (L1 - KERNELS[1]) // STRIDES[1] + 1           # 8

# Batch tile: multiple of 8/128/256, working set << default scoped VMEM on
# v5e (16 MiB), v6e (32 MiB) and v7x (32 MiB scoped / 64 MiB physical).
# For very large tiles raise vmem_limit_bytes in pltpu.CompilerParams.
B_TILE_DEFAULT = 256


def _gelu(x):
    # exact erf-based GELU == torch.nn.GELU() default
    # TODO(synk): the tanh-approx GELU would run on the EUP slot (v6e/v7x) but
    #             gives up exact parity with torch.nn.GELU, so erf is kept.
    return 0.5 * x * (1.0 + jax.lax.erf(x * 0.7071067811865476))


def _policy_kernel(x_ref, port_ref,
                   w1_ref, b1_ref, w2_ref, b2_ref,
                   wpp_ref, bpp_ref, wpo_ref, bpo_ref,
                   wh_ref, bh_ref,
                   out_ref):
    # x_ref: (B_TILE, WINDOW_LEN*N_FEATS) time-major flattened prices.
    x = x_ref[...]

    # Conv1 + GELU: one MXU matmul against a banded dense weight.
    h1 = _gelu(jnp.dot(x, w1_ref[...], preferred_element_type=jnp.float32)
               + b1_ref[...])                                 # (B, L1*C1)

    # Conv2 + GELU: same trick.
    h2 = _gelu(jnp.dot(h1, w2_ref[...], preferred_element_type=jnp.float32)
               + b2_ref[...])                                 # (B, L2*C2)

    # price_project over the flattened conv output: single K=256 matmul.
    price_emb = (jnp.dot(h2, wpp_ref[...], preferred_element_type=jnp.float32)
                 + bpp_ref[...])                              # (B, d_model)

    port_emb = (jnp.dot(port_ref[...], wpo_ref[...],
                        preferred_element_type=jnp.float32)
                + bpo_ref[...])                               # (B, d_model)

    state_emb = _gelu(price_emb * port_emb)

    # Output head, columns reordered atom-major: col = atom*N_ASSETS + asset.
    logits = (jnp.dot(state_emb, wh_ref[...],
                      preferred_element_type=jnp.float32)
              + bh_ref[...])                                  # (B, ATOMS*N_ASSETS)

    # Vectorized argmax over the action atoms, first-maximal-index tie-break
    # (torch.argmax rule). Pure VPU: compares + selects over (B, N_ASSETS).
    best = logits[:, 0:N_ASSETS]
    idx = jnp.zeros(best.shape, jnp.int32)
    for t in range(1, ACTION_ATOMS):
        ct = logits[:, t * N_ASSETS:(t + 1) * N_ASSETS]
        idx = jnp.where(ct > best, jnp.int32(t), idx)
        best = jnp.maximum(best, ct)

    out_ref[...] = idx                                        # (B, N_ASSETS) int32


def _round_up(x, m):
    return (x + m - 1) // m * m


def pack_params(params):
    """One-time, wrapper-side re-layout of module parameters into the
    lane-dense 2-D operands the kernel consumes (do at load time in prod)."""
    w1, b1, w2, b2, wpp, bpp, wpo, bpo, wh, bh = params
    c1, c2 = CHANNELS

    # Valid Conv1d (stride 1) as a dense banded matrix over time-major
    # flattened activations:  W[(l+k)*Cin + ci, l*Cout + co] = w[k, ci, co].
    def conv_as_dense(w, l_in, l_out):
        k_sz, cin, cout = w.shape
        dense = jnp.zeros((l_in * cin, l_out * cout), jnp.float32)
        for k in range(k_sz):
            for l in range(l_out):
                dense = dense.at[(l + k) * cin:(l + k + 1) * cin,
                                 l * cout:(l + 1) * cout].set(w[k])
        return dense

    w1_dense = conv_as_dense(w1, WINDOW_LEN, L1)       # (W*F,   L1*C1)
    w2_dense = conv_as_dense(w2, L1, L2)               # (L1*C1, L2*C2)
    b1_big = jnp.tile(b1, (1, L1))                     # (1, L1*C1)
    b2_big = jnp.tile(b2, (1, L2))                     # (1, L2*C2)

    # price_project weight flattened to match the kernel's (l-major, c-minor)
    # conv-output flatten; wpp[l, c, :] already equals torch W[:, c*L2 + l].
    wpp_flat = wpp.reshape(L2 * c2, D_MODEL)           # (256, d_model)

    # Output head columns reordered atom-major:
    #   new col t*N_ASSETS + a  holds  original col a*ACTION_ATOMS + t.
    wh_r = (wh.reshape(D_MODEL, N_ASSETS, ACTION_ATOMS)
              .transpose(0, 2, 1).reshape(D_MODEL, ACTION_ATOMS * N_ASSETS))
    bh_r = (bh.reshape(1, N_ASSETS, ACTION_ATOMS)
              .transpose(0, 2, 1).reshape(1, ACTION_ATOMS * N_ASSETS))

    return [w1_dense, b1_big, w2_dense, b2_big,
            wpp_flat, bpp, wpo, bpo, wh_r, bh_r]


def conv_policy_sacd_forward(price, portfolio, params, *, b_tile=B_TILE_DEFAULT):
    """price: (bs, window_len, n_feats) f32; portfolio: (bs, n_assets) f32.
    Returns greedy actions (bs, n_assets, 1) int32 (torch would be int64)."""
    bs = price.shape[0]
    packed = pack_params(params)

    b_tile = int(min(b_tile, _round_up(bs, 8)))
    bs_pad = _round_up(bs, b_tile)

    x = price.reshape(bs, WINDOW_LEN * N_FEATS).astype(jnp.float32)
    port = portfolio.astype(jnp.float32)
    if bs_pad != bs:
        x = jnp.pad(x, ((0, bs_pad - bs), (0, 0)))
        port = jnp.pad(port, ((0, bs_pad - bs), (0, 0)))

    # Weights: full-array blocks with constant index maps -> fetched once,
    # never re-DMA'd as the (parallel) batch-tile grid advances.
    w_specs = [pl.BlockSpec(p.shape, lambda i: (0, 0)) for p in packed]

    greedy = pl.pallas_call(
        _policy_kernel,
        out_shape=jax.ShapeDtypeStruct((bs_pad, N_ASSETS), jnp.int32),
        grid=(bs_pad // b_tile,),
        in_specs=[
            pl.BlockSpec((b_tile, WINDOW_LEN * N_FEATS), lambda i: (i, 0)),
            pl.BlockSpec((b_tile, N_ASSETS), lambda i: (i, 0)),
            *w_specs,
        ],
        out_specs=pl.BlockSpec((b_tile, N_ASSETS), lambda i: (i, 0)),
        compiler_params=pltpu.CompilerParams(
            dimension_semantics=("parallel",),   # batch tiles -> both TCs on v7x
        ),
    )(x, port, *packed)

    # torch: action_logits.argmax(dim=-1, keepdim=True) -> (bs, n_assets, 1)
    return greedy[:bs].reshape(bs, N_ASSETS)[..., None]


def init_params(key):
    # Deterministic synthetic parameters (shapes match the PyTorch module).
    # TODO(synk): orthogonal_initialization is not reproduced; plain scaled
    #             normals are used for this synthetic test.
    ks = jax.random.split(key, 10)
    n = lambda k, shape, s=0.1: s * jax.random.normal(k, shape, dtype=jnp.float32)
    w1  = n(ks[0], (KERNELS[0], N_FEATS, CHANNELS[0]))       # conv1 (K, Cin, Cout)
    b1  = n(ks[1], (1, CHANNELS[0]))
    w2  = n(ks[2], (KERNELS[1], CHANNELS[0], CHANNELS[1]))   # conv2 (K, Cin, Cout)
    b2  = n(ks[3], (1, CHANNELS[1]))
    wpp = n(ks[4], (L2, CHANNELS[1], D_MODEL))               # price_project weight
    bpp = n(ks[5], (1, D_MODEL))
    wpo = n(ks[6], (N_ASSETS, D_MODEL))                      # port_project.weight.T
    bpo = n(ks[7], (1, D_MODEL))
    wh  = n(ks[8], (D_MODEL, N_ASSETS * ACTION_ATOMS))       # output_head.weight.T
    bh  = n(ks[9], (1, N_ASSETS * ACTION_ATOMS))
    return [w1, b1, w2, b2, wpp, bpp, wpo, bpo, wh, bh]


def reference_forward(price, portfolio, params):
    """Pure-JAX reference mirroring the PyTorch forward (self-check)."""
    w1, b1, w2, b2, wpp, bpp, wpo, bpo, wh, bh = params
    bs = price.shape[0]

    def conv1d_valid(h, w, b):          # h: (bs, L, Cin); w: (K, Cin, Cout)
        K, _, cout = w.shape
        l_out = h.shape[1] - K + 1
        out = jnp.zeros((bs, l_out, cout), jnp.float32)
        for k in range(K):
            out = out + jnp.einsum('blc,cd->bld', h[:, k:k + l_out, :], w[k])
        return out + b.reshape(1, 1, cout)

    h1 = _gelu(conv1d_valid(price, w1, b1))            # (bs, L1, C1)
    h2 = _gelu(conv1d_valid(h1, w2, b2))               # (bs, L2, C2)
    flat = h2.reshape(bs, L2 * CHANNELS[1])            # l-major, c-minor
    price_emb = flat @ wpp.reshape(L2 * CHANNELS[1], D_MODEL) + bpp
    port_emb = portfolio @ wpo + bpo
    state_emb = _gelu(price_emb * port_emb)
    logits = state_emb @ wh + bh
    return jnp.argmax(logits.reshape(bs, N_ASSETS, ACTION_ATOMS), axis=-1)


if __name__ == "__main__":
    key = jax.random.PRNGKey(0)
    kp, kprice, kport = jax.random.split(key, 3)
    params = init_params(kp)

    bs = 2
    price = jax.random.normal(kprice, (bs, WINDOW_LEN, N_FEATS), dtype=jnp.float32)
    portfolio = jax.random.normal(kport, (bs, N_ASSETS), dtype=jnp.float32)

    greedy_actions = conv_policy_sacd_forward(price, portfolio, params)
    jax.block_until_ready(greedy_actions)
    assert greedy_actions.shape == (bs, N_ASSETS, 1)
    assert greedy_actions.dtype == jnp.int32

    ref = reference_forward(price, portfolio, params)
    assert bool(jnp.all(ref == greedy_actions[..., 0])), "mismatch vs JAX reference"
    print("KERNEL_OK")
</pallas_src>

<mosaic_0001>
module attributes {stable_mosaic.version = 11 : i64} {
  func.func @_policy_kernel(%arg0: i32, %arg1: memref<8x64xf32, #tpu.memory_space<vmem>>, %arg2: memref<8x4xf32, #tpu.memory_space<vmem>>, %arg3: memref<64x384xf32, #tpu.memory_space<vmem>>, %arg4: memref<1x384xf32, #tpu.memory_space<vmem>>, %arg5: memref<384x256xf32, #tpu.memory_space<vmem>>, %arg6: memref<1x256xf32, #tpu.memory_space<vmem>>, %arg7: memref<256x32xf32, #tpu.memory_space<vmem>>, %arg8: memref<1x32xf32, #tpu.memory_space<vmem>>, %arg9: memref<4x32xf32, #tpu.memory_space<vmem>>, %arg10: memref<1x32xf32, #tpu.memory_space<vmem>>, %arg11: memref<32x12xf32, #tpu.memory_space<vmem>>, %arg12: memref<1x12xf32, #tpu.memory_space<vmem>>, %arg13: memref<8x4xi32, #tpu.memory_space<vmem>>) attributes {dimension_semantics = [#tpu.dimension_semantics<parallel>], iteration_bounds = array<i64: 1>, scalar_prefetch = 0 : i64, scratch_operands = 0 : i64, tpu.core_type = #tpu.core_type<tc>, window_params = [{transform_indices = @transform_0, window_bounds = array<i64: 8, 64>}, {transform_indices = @transform_1, window_bounds = array<i64: 8, 4>}, {pipeline_mode = #tpu.pipeline_mode<synchronous>, transform_indices = @transform_2, window_bounds = array<i64: 64, 384>}, {pipeline_mode = #tpu.pipeline_mode<synchronous>, transform_indices = @transform_3, window_bounds = array<i64: 1, 384>}, {pipeline_mode = #tpu.pipeline_mode<synchronous>, transform_indices = @transform_4, window_bounds = array<i64: 384, 256>}, {pipeline_mode = #tpu.pipeline_mode<synchronous>, transform_indices = @transform_5, window_bounds = array<i64: 1, 256>}, {pipeline_mode = #tpu.pipeline_mode<synchronous>, transform_indices = @transform_6, window_bounds = array<i64: 256, 32>}, {pipeline_mode = #tpu.pipeline_mode<synchronous>, transform_indices = @transform_7, window_bounds = array<i64: 1, 32>}, {pipeline_mode = #tpu.pipeline_mode<synchronous>, transform_indices = @transform_8, window_bounds = array<i64: 4, 32>}, {pipeline_mode = #tpu.pipeline_mode<synchronous>, transform_indices = @transform_9, window_bounds = array<i64: 1, 32>}, {pipeline_mode = #tpu.pipeline_mode<synchronous>, transform_indices = @transform_10, window_bounds = array<i64: 32, 12>}, {pipeline_mode = #tpu.pipeline_mode<synchronous>, transform_indices = @transform_11, window_bounds = array<i64: 1, 12>}, {transform_indices = @transform_12, window_bounds = array<i64: 8, 4>}]} {
    %c0 = arith.constant 0 : index
    %c0_0 = arith.constant 0 : index
    %0 = vector.load %arg1[%c0, %c0_0] : memref<8x64xf32, #tpu.memory_space<vmem>>, vector<8x64xf32>
    %c0_1 = arith.constant 0 : index
    %c0_2 = arith.constant 0 : index
    %1 = vector.load %arg3[%c0_1, %c0_2] : memref<64x384xf32, #tpu.memory_space<vmem>>, vector<64x384xf32>
    %cst = arith.constant dense<0.000000e+00> : vector<8x384xf32>
    %2 = tpu.matmul %0, %1, %cst {dimension_numbers = #tpu.dot_dimension_numbers<[1], [0], [0], [1], [0, 0, 1, 1], [], []>} : vector<8x64xf32>, vector<64x384xf32>, vector<8x384xf32> -> vector<8x384xf32>
    %c0_3 = arith.constant 0 : index
    %c0_4 = arith.constant 0 : index
    %3 = vector.load %arg4[%c0_3, %c0_4] : memref<1x384xf32, #tpu.memory_space<vmem>>, vector<1x384xf32>
    %4 = vector.broadcast %3 : vector<1x384xf32> to vector<8x384xf32>
    %5 = arith.addf %2, %4 : vector<8x384xf32>
    %cst_5 = arith.constant 5.000000e-01 : f32
    %6 = vector.broadcast %cst_5 : f32 to vector<8x384xf32>
    %7 = arith.mulf %6, %5 : vector<8x384xf32>
    %cst_6 = arith.constant 0.707106769 : f32
    %8 = vector.broadcast %cst_6 : f32 to vector<8x384xf32>
    %9 = arith.mulf %5, %8 : vector<8x384xf32>
    %10 = math.erf %9 : vector<8x384xf32>
    %cst_7 = arith.constant 1.000000e+00 : f32
    %11 = vector.broadcast %cst_7 : f32 to vector<8x384xf32>
    %12 = arith.addf %11, %10 : vector<8x384xf32>
    %13 = arith.mulf %7, %12 : vector<8x384xf32>
    %c0_8 = arith.constant 0 : index
    %c0_9 = arith.constant 0 : index
    %14 = vector.load %arg5[%c0_8, %c0_9] : memref<384x256xf32, #tpu.memory_space<vmem>>, vector<384x256xf32>
    %cst_10 = arith.constant dense<0.000000e+00> : vector<8x256xf32>
    %15 = tpu.matmul %13, %14, %cst_10 {dimension_numbers = #tpu.dot_dimension_numbers<[1], [0], [0], [1], [0, 0, 1, 1], [], []>} : vector<8x384xf32>, vector<384x256xf32>, vector<8x256xf32> -> vector<8x256xf32>
    %c0_11 = arith.constant 0 : index
    %c0_12 = arith.constant 0 : index
    %16 = vector.load %arg6[%c0_11, %c0_12] : memref<1x256xf32, #tpu.memory_space<vmem>>, vector<1x256xf32>
    %17 = vector.broadcast %16 : vector<1x256xf32> to vector<8x256xf32>
    %18 = arith.addf %15, %17 : vector<8x256xf32>
    %cst_13 = arith.constant 5.000000e-01 : f32
    %19 = vector.broadcast %cst_13 : f32 to vector<8x256xf32>
    %20 = arith.mulf %19, %18 : vector<8x256xf32>
    %cst_14 = arith.constant 0.707106769 : f32
    %21 = vector.broadcast %cst_14 : f32 to vector<8x256xf32>
    %22 = arith.mulf %18, %21 : vector<8x256xf32>
    %23 = math.erf %22 : vector<8x256xf32>
    %cst_15 = arith.constant 1.000000e+00 : f32
    %24 = vector.broadcast %cst_15 : f32 to vector<8x256xf32>
    %25 = arith.addf %24, %23 : vector<8x256xf32>
    %26 = arith.mulf %20, %25 : vector<8x256xf32>
    %c0_16 = arith.constant 0 : index
    %c0_17 = arith.constant 0 : index
    %27 = vector.load %arg7[%c0_16, %c0_17] : memref<256x32xf32, #tpu.memory_space<vmem>>, vector<256x32xf32>
    %cst_18 = arith.constant dense<0.000000e+00> : vector<8x32xf32>
    %28 = tpu.matmul %26, %27, %cst_18 {dimension_numbers = #tpu.dot_dimension_numbers<[1], [0], [0], [1], [0, 0, 1, 1], [], []>} : vector<8x256xf32>, vector<256x32xf32>, vector<8x32xf32> -> vector<8x32xf32>
    %c0_19 = arith.constant 0 : index
    %c0_20 = arith.constant 0 : index
    %29 = vector.load %arg8[%c0_19, %c0_20] : memref<1x32xf32, #tpu.memory_space<vmem>>, vector<1x32xf32>
    %30 = vector.broadcast %29 : vector<1x32xf32> to vector<8x32xf32>
    %31 = arith.addf %28, %30 : vector<8x32xf32>
    %c0_21 = arith.constant 0 : index
    %c0_22 = arith.constant 0 : index
    %32 = vector.load %arg2[%c0_21, %c0_22] : memref<8x4xf32, #tpu.memory_space<vmem>>, vector<8x4xf32>
    %c0_23 = arith.constant 0 : index
    %c0_24 = arith.constant 0 : index
    %33 = vector.load %arg9[%c0_23, %c0_24] : memref<4x32xf32, #tpu.memory_space<vmem>>, vector<4x32xf32>
    %cst_25 = arith.constant dense<0.000000e+00> : vector<8x32xf32>
    %34 = tpu.matmul %32, %33, %cst_25 {dimension_numbers = #tpu.dot_dimension_numbers<[1], [0], [0], [1], [0, 0, 1, 1], [], []>} : vector<8x4xf32>, vector<4x32xf32>, vector<8x32xf32> -> vector<8x32xf32>
    %c0_26 = arith.constant 0 : index
    %c0_27 = arith.constant 0 : index
    %35 = vector.load %arg10[%c0_26, %c0_27] : memref<1x32xf32, #tpu.memory_space<vmem>>, vector<1x32xf32>
    %36 = vector.broadcast %35 : vector<1x32xf32> to vector<8x32xf32>
    %37 = arith.addf %34, %36 : vector<8x32xf32>
    %38 = arith.mulf %31, %37 : vector<8x32xf32>
    %cst_28 = arith.constant 5.000000e-01 : f32
    %39 = vector.broadcast %cst_28 : f32 to vector<8x32xf32>
    %40 = arith.mulf %39, %38 : vector<8x32xf32>
    %cst_29 = arith.constant 0.707106769 : f32
    %41 = vector.broadcast %cst_29 : f32 to vector<8x32xf32>
    %42 = arith.mulf %38, %41 : vector<8x32xf32>
    %43 = math.erf %42 : vector<8x32xf32>
    %cst_30 = arith.constant 1.000000e+00 : f32
    %44 = vector.broadcast %cst_30 : f32 to vector<8x32xf32>
    %45 = arith.addf %44, %43 : vector<8x32xf32>
    %46 = arith.mulf %40, %45 : vector<8x32xf32>
    %c0_31 = arith.constant 0 : index
    %c0_32 = arith.constant 0 : index
    %47 = vector.load %arg11[%c0_31, %c0_32] : memref<32x12xf32, #tpu.memory_space<vmem>>, vector<32x12xf32>
    %cst_33 = arith.constant dense<0.000000e+00> : vector<8x12xf32>
    %48 = tpu.matmul %46, %47, %cst_33 {dimension_numbers = #tpu.dot_dimension_numbers<[1], [0], [0], [1], [0, 0, 1, 1], [], []>} : vector<8x32xf32>, vector<32x12xf32>, vector<8x12xf32> -> vector<8x12xf32>
    %c0_34 = arith.constant 0 : index
    %c0_35 = arith.constant 0 : index
    %49 = vector.load %arg12[%c0_34, %c0_35] : memref<1x12xf32, #tpu.memory_space<vmem>>, vector<1x12xf32>
    %50 = vector.broadcast %49 : vector<1x12xf32> to vector<8x12xf32>
    %51 = arith.addf %48, %50 : vector<8x12xf32>
    %52 = vector.extract_strided_slice %51 {offsets = [0, 0], sizes = [8, 4], strides = [1, 1]} : vector<8x12xf32> to vector<8x4xf32>
    %c0_i32 = arith.constant 0 : i32
    %53 = vector.broadcast %c0_i32 : i32 to vector<8x4xi32>
    %54 = vector.extract_strided_slice %51 {offsets = [0, 4], sizes = [8, 4], strides = [1, 1]} : vector<8x12xf32> to vector<8x4xf32>
    %55 = arith.cmpf ogt, %54, %52 : vector<8x4xf32>
    %c1_i32 = arith.constant 1 : i32
    %56 = vector.broadcast %c1_i32 : i32 to vector<8x4xi32>
    %57 = arith.select %55, %56, %53 : vector<8x4xi1>, vector<8x4xi32>
    %58 = arith.maximumf %52, %54 : vector<8x4xf32>
    %59 = vector.extract_strided_slice %51 {offsets = [0, 8], sizes = [8, 4], strides = [1, 1]} : vector<8x12xf32> to vector<8x4xf32>
    %60 = arith.cmpf ogt, %59, %58 : vector<8x4xf32>
    %c2_i32 = arith.constant 2 : i32
    %61 = vector.broadcast %c2_i32 : i32 to vector<8x4xi32>
    %62 = arith.select %60, %61, %57 : vector<8x4xi1>, vector<8x4xi32>
    %c0_36 = arith.constant 0 : index
    %c0_37 = arith.constant 0 : index
    %63 = vector.load %arg13[%c0_36, %c0_37] : memref<8x4xi32, #tpu.memory_space<vmem>>, vector<8x4xi32>
    tpu.vector_store %arg13[%c0_36, %c0_37], %62 {strides = array<i32>} : memref<8x4xi32, #tpu.memory_space<vmem>>, vector<8x4xi32>,
    return
  }
  func.func @transform_0(%arg0: i32) -> (i32, i32) {
    %c0_i32 = arith.constant 0 : i32
    %c0_i32_0 = arith.constant 0 : i32
    return %arg0, %c0_i32 : i32, i32
  }
  func.func @transform_1(%arg0: i32) -> (i32, i32) {
    %c0_i32 = arith.constant 0 : i32
    %c0_i32_0 = arith.constant 0 : i32
    return %arg0, %c0_i32 : i32, i32
  }
  func.func @transform_2(%arg0: i32) -> (i32, i32) {
    %c0_i32 = arith.constant 0 : i32
    %c0_i32_0 = arith.constant 0 : i32
    %c0_i32_1 = arith.constant 0 : i32
    return %c0_i32, %c0_i32_0 : i32, i32
  }
  func.func @transform_3(%arg0: i32) -> (i32, i32) {
    %c0_i32 = arith.constant 0 : i32
    %c0_i32_0 = arith.constant 0 : i32
    %c0_i32_1 = arith.constant 0 : i32
    return %c0_i32, %c0_i32_0 : i32, i32
  }
  func.func @transform_4(%arg0: i32) -> (i32, i32) {
    %c0_i32 = arith.constant 0 : i32
    %c0_i32_0 = arith.constant 0 : i32
    %c0_i32_1 = arith.constant 0 : i32
    return %c0_i32, %c0_i32_0 : i32, i32
  }
  func.func @transform_5(%arg0: i32) -> (i32, i32) {
    %c0_i32 = arith.constant 0 : i32
    %c0_i32_0 = arith.constant 0 : i32
    %c0_i32_1 = arith.constant 0 : i32
    return %c0_i32, %c0_i32_0 : i32, i32
  }
  func.func @transform_6(%arg0: i32) -> (i32, i32) {
    %c0_i32 = arith.constant 0 : i32
    %c0_i32_0 = arith.constant 0 : i32
    %c0_i32_1 = arith.constant 0 : i32
    return %c0_i32, %c0_i32_0 : i32, i32
  }
  func.func @transform_7(%arg0: i32) -> (i32, i32) {
    %c0_i32 = arith.constant 0 : i32
    %c0_i32_0 = arith.constant 0 : i32
    %c0_i32_1 = arith.constant 0 : i32
    return %c0_i32, %c0_i32_0 : i32, i32
  }
  func.func @transform_8(%arg0: i32) -> (i32, i32) {
    %c0_i32 = arith.constant 0 : i32
    %c0_i32_0 = arith.constant 0 : i32
    %c0_i32_1 = arith.constant 0 : i32
    return %c0_i32, %c0_i32_0 : i32, i32
  }
  func.func @transform_9(%arg0: i32) -> (i32, i32) {
    %c0_i32 = arith.constant 0 : i32
    %c0_i32_0 = arith.constant 0 : i32
    %c0_i32_1 = arith.constant 0 : i32
    return %c0_i32, %c0_i32_0 : i32, i32
  }
  func.func @transform_10(%arg0: i32) -> (i32, i32) {
    %c0_i32 = arith.constant 0 : i32
    %c0_i32_0 = arith.constant 0 : i32
    %c0_i32_1 = arith.constant 0 : i32
    return %c0_i32, %c0_i32_0 : i32, i32
  }
  func.func @transform_11(%arg0: i32) -> (i32, i32) {
    %c0_i32 = arith.constant 0 : i32
    %c0_i32_0 = arith.constant 0 : i32
    %c0_i32_1 = arith.constant 0 : i32
    return %c0_i32, %c0_i32_0 : i32, i32
  }
  func.func @transform_12(%arg0: i32) -> (i32, i32) {
    %c0_i32 = arith.constant 0 : i32
    %c0_i32_0 = arith.constant 0 : i32
    return %arg0, %c0_i32 : i32, i32
  }
}

</mosaic_0001>

<llo_original>
// kernel: tpu_custom_call.1
$region0: #{tpu_custom_call.1}
  #allocation0 [shape = 'u32[]', space=smem, size = 0x4, offset = 0x4, fixed_abs, tag = 'smem constant byte address 0x4 - core index']
  #allocation1 [shape = 'u32[144,128]{1,0:T(1,128)}', space=vmem, size = 0x12000, scoped, tag = 'internal scratch']
  %s0 = inlined_call_operand.vmem [shape: f32[8,64], index: 0, kind: input, shape index: {}]
  %s1 = inlined_call_operand.vmem [shape: f32[8,4], index: 1, kind: input, shape index: {}]
  %s2 = inlined_call_operand.vmem [shape: f32[64,384], index: 2, kind: input, shape index: {}]
  %s3 = inlined_call_operand.vmem [shape: f32[1,384], index: 3, kind: input, shape index: {}]
  %s4 = inlined_call_operand.hbm [shape: f32[384,256], index: 4, kind: input, shape index: {}]
  %s5 = inlined_call_operand.vmem [shape: f32[1,256], index: 5, kind: input, shape index: {}]
  %s6 = inlined_call_operand.vmem [shape: f32[256,32], index: 6, kind: input, shape index: {}]
  %s7 = inlined_call_operand.vmem [shape: f32[1,32], index: 7, kind: input, shape index: {}]
  %s8 = inlined_call_operand.vmem [shape: f32[4,32], index: 8, kind: input, shape index: {}]
  %s9 = inlined_call_operand.vmem [shape: f32[1,32], index: 9, kind: input, shape index: {}]
  %s10 = inlined_call_operand.vmem [shape: f32[32,12], index: 10, kind: input, shape index: {}]
  %s11 = inlined_call_operand.vmem [shape: f32[1,12], index: 11, kind: input, shape index: {}]
  %s12 = inlined_call_operand.vmem [shape: s32[8,4], index: 12, kind: output, shape index: {}]
  %s13 = sld [smem:[#allocation0]]
  $region62: #{tpu_custom_call.1} parent=0
    _
  %s15 = ssub.s32 1, %s13
  %s16 = scalar_select 0, %s15, %s13
  $region1: #{tpu_custom_call.1} parent=0
    #allocation2 [shape = 'u8[393216]{0}', space=vmem, size = 0x60000, scoped, tag = 'input window, operand 4, single buffered']
    #allocation3 [shape = 's32[1]{0}', space=sflag, size = 0x4, scoped, tag = 'scoped memory for tpu_custom_call.1']
    %17 = vsyncpa [#allocation3], 0
    // Predicated region
    $region2: #{tpu_custom_call.1} parent=1 // pred_check
      _
    $region3: #{tpu_custom_call.1} parent=1 // pred_check_branch
      %19 = sbr.rel (0) target = $region5
    $region4: #{tpu_custom_call.1} parent=1 // pred_region
      _
    $region5: #{tpu_custom_call.1} parent=1 // pred_fallthru
      _
    // Predicated region
    $region6: #{tpu_custom_call.1} parent=1 // pred_check
      _
    $region7: #{tpu_custom_call.1} parent=1 // pred_check_branch
      %21 = sbr.rel (0) target = $region9
    $region8: #{tpu_custom_call.1} parent=1 // pred_region
      _
    $region9: #{tpu_custom_call.1} parent=1 // pred_fallthru
      _
    // Predicated region
    $region10: #{tpu_custom_call.1} parent=1 // pred_check
      _
    $region11: #{tpu_custom_call.1} parent=1 // pred_check_branch
      %23 = sbr.rel (0) target = $region13
    $region12: #{tpu_custom_call.1} parent=1 // pred_region
      _
    $region13: #{tpu_custom_call.1} parent=1 // pred_fallthru
      _
    // Predicated region
    $region14: #{tpu_custom_call.1} parent=1 // pred_check
      _
    $region15: #{tpu_custom_call.1} parent=1 // pred_check_branch
      %25 = sbr.rel (0) target = $region17
    $region16: #{tpu_custom_call.1} parent=1 // pred_region
      _
    $region17: #{tpu_custom_call.1} parent=1 // pred_fallthru
      _
    // Predicated region
    $region18: #{tpu_custom_call.1} parent=1 // pred_check
      _
    $region19: #{tpu_custom_call.1} parent=1 // pred_check_branch
      %27 = sbr.rel (0) target = $region21
    $region20: #{tpu_custom_call.1} parent=1 // pred_region
      %s29 = ssub.s32 12288, 12288
      %30 = vsyncadd [#allocation3], %s29
      %s31 = sshll.u32 [#allocation2], 4
      %s32 = int_to_ptr.vmem [resolvable:$true] %s31
      %37 = dma.hbm_to_vmem [thread:$0]  %s4, 12288, %s32, [#allocation3], 256, 256, 16
    $region21: #{tpu_custom_call.1} parent=1 // pred_fallthru
      _
    // Predicated region
    $region22: #{tpu_custom_call.1} parent=1 // pred_check
      _
    $region23: #{tpu_custom_call.1} parent=1 // pred_check_branch
      %39 = sbr.rel (0) target = $region25
    $region24: #{tpu_custom_call.1} parent=1 // pred_region
      _
    $region25: #{tpu_custom_call.1} parent=1 // pred_fallthru
      _
    // Predicated region
    $region26: #{tpu_custom_call.1} parent=1 // pred_check
      _
    $region27: #{tpu_custom_call.1} parent=1 // pred_check_branch
      %41 = sbr.rel (0) target = $region29
    $region28: #{tpu_custom_call.1} parent=1 // pred_region
      _
    $region29: #{tpu_custom_call.1} parent=1 // pred_fallthru
      _
    // Predicated region
    $region30: #{tpu_custom_call.1} parent=1 // pred_check
      _
    $region31: #{tpu_custom_call.1} parent=1 // pred_check_branch
      %43 = sbr.rel (0) target = $region33
    $region32: #{tpu_custom_call.1} parent=1 // pred_region
      _
    $region33: #{tpu_custom_call.1} parent=1 // pred_fallthru
      _
    // Predicated region
    $region34: #{tpu_custom_call.1} parent=1 // pred_check
      _
    $region35: #{tpu_custom_call.1} parent=1 // pred_check_branch
      %45 = sbr.rel (0) target = $region37
    $region36: #{tpu_custom_call.1} parent=1 // pred_region
      _
    $region37: #{tpu_custom_call.1} parent=1 // pred_fallthru
      _
    // Predicated region
    $region38: #{tpu_custom_call.1} parent=1 // pred_check
      _
    $region39: #{tpu_custom_call.1} parent=1 // pred_check_branch
      %47 = sbr.rel (0) target = $region41
    $region40: #{tpu_custom_call.1} parent=1 // pred_region
      _
    $region41: #{tpu_custom_call.1} parent=1 // pred_fallthru
      _
    // Predicated region
    $region42: #{tpu_custom_call.1} parent=1 // pred_check
      _
    $region43: #{tpu_custom_call.1} parent=1 // pred_check_branch
      %49 = sbr.rel (0) target = $region45
    $region44: #{tpu_custom_call.1} parent=1 // pred_region
      _
    $region45: #{tpu_custom_call.1} parent=1 // pred_fallthru
      _
    // Predicated region
    $region46: #{tpu_custom_call.1} parent=1 // pred_check
      _
    $region47: #{tpu_custom_call.1} parent=1 // pred_check_branch
      %51 = sbr.rel (0) target = $region49
    $region48: #{tpu_custom_call.1} parent=1 // pred_region
      _
    $region49: #{tpu_custom_call.1} parent=1 // pred_fallthru
      _
    // Predicated region
    $region50: #{tpu_custom_call.1} parent=1 // pred_check
      _
    $region51: #{tpu_custom_call.1} parent=1 // pred_check_branch
      %53 = sbr.rel (0) target = $region53
    $region52: #{tpu_custom_call.1} parent=1 // pred_region
      %54 = dma.done [#allocation3], 12288
    $region53: #{tpu_custom_call.1} parent=1 // pred_fallthru
      _
    %v55 = vld [vmem:[%s0] sm:$0xff]
    %v56 = vld [vmem:[%s2] sm:$0xff]
    %v57 = vld [vmem:[%s2 + $0x8] sm:$0xff]
    %v58 = vld [vmem:[%s2 + $0x10] sm:$0xff]
    %v59 = vld [vmem:[%s2 + $0x18] sm:$0xff]
    %v60 = vld [vmem:[%s2 + $0x20] sm:$0xff]
    %v61 = vld [vmem:[%s2 + $0x28] sm:$0xff]
    %v62 = vld [vmem:[%s2 + $0x30] sm:$0xff]
    %v63 = vld [vmem:[%s2 + $0x38] sm:$0xff]
    %v64 = vld [vmem:[%s2 + $0x40] sm:$0xff]
    %v65 = vld [vmem:[%s2 + $0x48] sm:$0xff]
    %v66 = vld [vmem:[%s2 + $0x50] sm:$0xff]
    %v67 = vld [vmem:[%s2 + $0x58] sm:$0xff]
    %v68 = vld [vmem:[%s2 + $0x60] sm:$0xff]
    %v69 = vld [vmem:[%s2 + $0x68] sm:$0xff]
    %v70 = vld [vmem:[%s2 + $0x70] sm:$0xff]
    %v71 = vld [vmem:[%s2 + $0x78] sm:$0xff]
    %v72 = vld [vmem:[%s2 + $0x80] sm:$0xff]
    %v73 = vld [vmem:[%s2 + $0x88] sm:$0xff]
    %v74 = vld [vmem:[%s2 + $0x90] sm:$0xff]
    %v75 = vld [vmem:[%s2 + $0x98] sm:$0xff]
    %v76 = vld [vmem:[%s2 + $0xa0] sm:$0xff]
    %v77 = vld [vmem:[%s2 + $0xa8] sm:$0xff]
    %v78 = vld [vmem:[%s2 + $0xb0] sm:$0xff]
    %v79 = vld [vmem:[%s2 + $0xb8] sm:$0xff]
    %v80 = vld [vmem:[%s3] sm:$0x7]
    %v82 = vlaneseq
    %v83 = vshrl.u32 %v82, 7
    %v84 = vsub.s32 0, %v83
    %v85 = vrot.slane %v80, %v84
    %v86 = vlaneseq
    %v87 = vshrl.u32 %v86, 7
    %v88 = vsub.s32 1, %v87
    %v89 = vrot.slane %v80, %v88
    %v90 = vlaneseq
    %v91 = vshrl.u32 %v90, 7
    %v92 = vsub.s32 2, %v91
    %v93 = vrot.slane %v80, %v92
    %vm97 = vcmask 523264
    %v99 = vsel %vm97, %v55, 0
    %101 = vmatprep.subr.mxu0 %v57
    %102 = vmatpush1.msra.mxu0 %v56
    %103 = vmatprep.subr.mxu0 %v60
    %104 = vmatpush1.msra.mxu0 %v59
    %105 = vmatprep.subr.mxu0 %v63
    %106 = vmatpush1.msra.mxu0 %v62
    %107 = vmatprep.subr.mxu0 %v66
    %108 = vmatpush1.msra.mxu0 %v65
    %109 = vmatprep.subr.mxu0 %v69
    %110 = vmatpush1.msra.mxu0 %v68
    %111 = vmatprep.subr.mxu0 %v72
    %112 = vmatpush1.msra.mxu0 %v71
    %113 = vmatprep.subr.mxu0 %v75
    %114 = vmatpush1.msra.mxu0 %v74
    %115 = vmatprep.subr.mxu0 %v78
    %116 = vmatpush1.msra.mxu0 %v77
    %117 = vmatprep.subr.mxu0 0.0
    %118 = vmatpush1.msra.mxu0 0.0
    %119 = vmatprep.subr.mxu0 0.0
    %120 = vmatpush1.msra.mxu0 0.0
    %121 = vmatprep.subr.mxu0 0.0
    %122 = vmatpush1.msra.mxu0 0.0
    %123 = vmatprep.subr.mxu0 0.0
    %124 = vmatpush1.msra.mxu0 0.0
    %125 = vmatprep.subr.mxu0 0.0
    %126 = vmatpush1.msra.mxu0 0.0
    %127 = vmatprep.subr.mxu0 0.0
    %128 = vmatpush1.msra.mxu0 0.0
    %129 = vmatprep.subr.mxu0 0.0
    %130 = vmatpush1.msra.mxu0 0.0
    %131 = vmatprep.subr.mxu0 0.0
    %132 = vmatpush1.msra.mxu0 0.0
    %133 = vmatprep.subr.mxu0 0.0
    %134 = vmatpush1.msra.mxu0 0.0
    %135 = vmatprep.subr.mxu0 0.0
    %136 = vmatpush1.msra.mxu0 0.0
    %137 = vmatprep.subr.mxu0 0.0
    %138 = vmatpush1.msra.mxu0 0.0
    %139 = vmatprep.subr.mxu0 0.0
    %140 = vmatpush1.msra.mxu0 0.0
    %141 = vmatprep.subr.mxu0 0.0
    %142 = vmatpush1.msra.mxu0 0.0
    %143 = vmatprep.subr.mxu0 0.0
    %144 = vmatpush1.msra.mxu0 0.0
    %145 = vmatprep.subr.mxu0 0.0
    %146 = vmatpush1.msra.mxu0 0.0
    %147 = vmatprep.subr.mxu0 0.0
    %148 = vmatpush1.msra.mxu0 0.0
    %149 = vmatprep.subr.mxu0 0.0
    %150 = vmatpush1.msra.mxu0 0.0
    %151 = vmatprep.subr.mxu0 0.0
    %152 = vmatpush1.msra.mxu0 0.0
    %153 = vmatprep.subr.mxu0 0.0
    %154 = vmatpush1.msra.mxu0 0.0
    %155 = vmatprep.subr.mxu0 0.0
    %156 = vmatpush1.msra.mxu0 0.0
    %157 = vmatprep.subr.mxu0 0.0
    %158 = vmatpush1.msra.mxu0 0.0
    %159 = vmatprep.subr.mxu0 0.0
    %160 = vmatpush1.msra.mxu0 0.0
    %161 = vmatprep.subr.mxu0 0.0
    %162 = vmatpush1.msra.mxu0 0.0
    %163 = vmatprep.subr.mxu0 0.0
    %164 = vmatpush1.msra.mxu0 0.0
    %165 = vmatprep.mubr.f32.mxu0 0.0
    %166 = vmatmul.mubr.f32.gmra.mrb[0].mxu0 %v99
    %v167 = vpop.f32.mrb[0].mxu0
    %v168 = vadd.f32 %v85, %v167
    %v169 = vpop.f32.mrb[0].mxu0
    %v170 = vadd.f32 %v89, %v169
    %171 = vdwg.mxu0
    %172 = vmatprep.subr.mxu0 0.0
    %173 = vmatpush1.msra.mxu0 %v58
    %174 = vmatprep.subr.mxu0 0.0
    %175 = vmatpush1.msra.mxu0 %v61
    %176 = vmatprep.subr.mxu0 0.0
    %177 = vmatpush1.msra.mxu0 %v64
    %178 = vmatprep.subr.mxu0 0.0
    %179 = vmatpush1.msra.mxu0 %v67
    %180 = vmatprep.subr.mxu0 0.0
    %181 = vmatpush1.msra.mxu0 %v70
    %182 = vmatprep.subr.mxu0 0.0
    %183 = vmatpush1.msra.mxu0 %v73
    %184 = vmatprep.subr.mxu0 0.0
    %185 = vmatpush1.msra.mxu0 %v76
    %186 = vmatprep.subr.mxu0 0.0
    %187 = vmatpush1.msra.mxu0 %v79
    %188 = vmatprep.subr.mxu0 0.0
    %189 = vmatpush1.msra.mxu0 0.0
    %190 = vmatprep.subr.mxu0 0.0
    %191 = vmatpush1.msra.mxu0 0.0
    %192 = vmatprep.subr.mxu0 0.0
    %193 = vmatpush1.msra.mxu0 0.0
    %194 = vmatprep.subr.mxu0 0.0
    %195 = vmatpush1.msra.mxu0 0.0
    %196 = vmatprep.subr.mxu0 0.0
    %197 = vmatpush1.msra.mxu0 0.0
    %198 = vmatprep.subr.mxu0 0.0
    %199 = vmatpush1.msra.mxu0 0.0
    %200 = vmatprep.subr.mxu0 0.0
    %201 = vmatpush1.msra.mxu0 0.0
    %202 = vmatprep.subr.mxu0 0.0
    %203 = vmatpush1.msra.mxu0 0.0
    %204 = vmatprep.subr.mxu0 0.0
    %205 = vmatpush1.msra.mxu0 0.0
    %206 = vmatprep.subr.mxu0 0.0
    %207 = vmatpush1.msra.mxu0 0.0
    %208 = vmatprep.subr.mxu0 0.0
    %209 = vmatpush1.msra.mxu0 0.0
    %210 = vmatprep.subr.mxu0 0.0
    %211 = vmatpush1.msra.mxu0 0.0
    %212 = vmatprep.subr.mxu0 0.0
    %213 = vmatpush1.msra.mxu0 0.0
    %214 = vmatprep.subr.mxu0 0.0
    %215 = vmatpush1.msra.mxu0 0.0
    %216 = vmatprep.subr.mxu0 0.0
    %217 = vmatpush1.msra.mxu0 0.0
    %218 = vmatprep.subr.mxu0 0.0
    %219 = vmatpush1.msra.mxu0 0.0
    %220 = vmatprep.subr.mxu0 0.0
    %221 = vmatpush1.msra.mxu0 0.0
    %222 = vmatprep.subr.mxu0 0.0
    %223 = vmatpush1.msra.mxu0 0.0
    %224 = vmatprep.subr.mxu0 0.0
    %225 = vmatpush1.msra.mxu0 0.0
    %226 = vmatprep.subr.mxu0 0.0
    %227 = vmatpush1.msra.mxu0 0.0
    %228 = vmatprep.subr.mxu0 0.0
    %229 = vmatpush1.msra.mxu0 0.0
    %230 = vmatprep.subr.mxu0 0.0
    %231 = vmatpush1.msra.mxu0 0.0
    %232 = vmatprep.subr.mxu0 0.0
    %233 = vmatpush1.msra.mxu0 0.0
    %234 = vmatprep.subr.mxu0 0.0
    %235 = vmatpush1.msra.mxu0 0.0
    %236 = vmatprep.mubr.f32.mxu0 0.0
    %237 = vmatmul.mubr.f32.gmra.mrb[0].mxu0 %v99
    %v238 = vpop.f32.mrb[0].mxu0
    %v239 = vadd.f32 %v93, %v238
    %v240 = vpop.f32.mrb[0].mxu0
    %241 = vdwg.mxu0
    %v242 = vmul.f32 %v168, 0.5
    %v243 = vmul.f32 %v170, 0.5
    %v244 = vmul.f32 %v239, 0.5
    %v245 = vmul.f32 %v168, 0.70710677
    %v246 = vmul.f32 %v170, 0.70710677
    %v247 = vmul.f32 %v239, 0.70710677
    %v248 = verf.f32.pop %v245
    %v249 = verf.f32.pop %v246
    %v250 = verf.f32.pop %v247
    %v251 = vadd.f32 %v248, 1.0
    %v252 = vadd.f32 %v249, 1.0
    %v253 = vadd.f32 %v250, 1.0
    %v254 = vmul.f32 %v242, %v251
    %v255 = vmul.f32 %v243, %v252
    %v256 = vmul.f32 %v244, %v253
    %v257 = vld [vmem:[#allocation2] sm:$0xff]
    %v258 = vld [vmem:[#allocation2 + $0x8] sm:$0xff]
    %v259 = vld [vmem:[#allocation2 + $0x10] sm:$0xff]
    %v260 = vld [vmem:[#allocation2 + $0x18] sm:$0xff]
    %v261 = vld [vmem:[#allocation2 + $0x20] sm:$0xff]
    %v262 = vld [vmem:[#allocation2 + $0x28] sm:$0xff]
    %v263 = vld [vmem:[#allocation2 + $0x30] sm:$0xff]
    %v264 = vld [vmem:[#allocation2 + $0x38] sm:$0xff]
    %v265 = vld [vmem:[#allocation2 + $0x40] sm:$0xff]
    %v266 = vld [vmem:[#allocation2 + $0x48] sm:$0xff]
    %v267 = vld [vmem:[#allocation2 + $0x50] sm:$0xff]
    %v268 = vld [vmem:[#allocation2 + $0x58] sm:$0xff]
    %v269 = vld [vmem:[#allocation2 + $0x60] sm:$0xff]
    %v270 = vld [vmem:[#allocation2 + $0x68] sm:$0xff]
    %v271 = vld [vmem:[#allocation2 + $0x70] sm:$0xff]
    %v272 = vld [vmem:[#allocation2 + $0x78] sm:$0xff]
    %v273 = vld [vmem:[#allocation2 + $0x80] sm:$0xff]
    %v274 = vld [vmem:[#allocation2 + $0x88] sm:$0xff]
    %v275 = vld [vmem:[#allocation2 + $0x90] sm:$0xff]
    %v276 = vld [vmem:[#allocation2 + $0x98] sm:$0xff]
    %v277 = vld [vmem:[#allocation2 + $0xa0] sm:$0xff]
    %v278 = vld [vmem:[#allocation2 + $0xa8] sm:$0xff]
    %v279 = vld [vmem:[#allocation2 + $0xb0] sm:$0xff]
    %v280 = vld [vmem:[#allocation2 + $0xb8] sm:$0xff]
    %v281 = vld [vmem:[#allocation2 + $0xc0] sm:$0xff]
    %v282 = vld [vmem:[#allocation2 + $0xc8] sm:$0xff]
    %v283 = vld [vmem:[#allocation2 + $0xd0] sm:$0xff]
    %v284 = vld [vmem:[#allocation2 + $0xd8] sm:$0xff]
    %v285 = vld [vmem:[#allocation2 + $0xe0] sm:$0xff]
    %v286 = vld [vmem:[#allocation2 + $0xe8] sm:$0xff]
    %v287 = vld [vmem:[#allocation2 + $0xf0] sm:$0xff]
    %v288 = vld [vmem:[#allocation2 + $0xf8] sm:$0xff]
    %v289 = vld [vmem:[#allocation2 + $0x100] sm:$0xff]
    %v290 = vld [vmem:[#allocation2 + $0x108] sm:$0xff]
    %v291 = vld [vmem:[#allocation2 + $0x110] sm:$0xff]
    %v292 = vld [vmem:[#allocation2 + $0x118] sm:$0xff]
    %v293 = vld [vmem:[#allocation2 + $0x120] sm:$0xff]
    %v294 = vld [vmem:[#allocation2 + $0x128] sm:$0xff]
    %v295 = vld [vmem:[#allocation2 + $0x130] sm:$0xff]
    %v296 = vld [vmem:[#allocation2 + $0x138] sm:$0xff]
    %v297 = vld [vmem:[#allocation2 + $0x140] sm:$0xff]
    %v298 = vld [vmem:[#allocation2 + $0x148] sm:$0xff]
    %v299 = vld [vmem:[#allocation2 + $0x150] sm:$0xff]
    %v300 = vld [vmem:[#allocation2 + $0x158] sm:$0xff]
    %v301 = vld [vmem:[#allocation2 + $0x160] sm:$0xff]
    %v302 = vld [vmem:[#allocation2 + $0x168] sm:$0xff]
    %v303 = vld [vmem:[#allocation2 + $0x170] sm:$0xff]
    %v304 = vld [vmem:[#allocation2 + $0x178] sm:$0xff]
    %v305 = vld [vmem:[#allocation2 + $0x180] sm:$0xff]
    %v306 = vld [vmem:[#allocation2 + $0x188] sm:$0xff]
    %v307 = vld [vmem:[#allocation2 + $0x190] sm:$0xff]
    %v308 = vld [vmem:[#allocation2 + $0x198] sm:$0xff]
    %v309 = vld [vmem:[#allocation2 + $0x1a0] sm:$0xff]
    %v310 = vld [vmem:[#allocation2 + $0x1a8] sm:$0xff]
    %v311 = vld [vmem:[#allocation2 + $0x1b0] sm:$0xff]
    %v312 = vld [vmem:[#allocation2 + $0x1b8] sm:$0xff]
    %v313 = vld [vmem:[#allocation2 + $0x1c0] sm:$0xff]
    %v314 = vld [vmem:[#allocation2 + $0x1c8] sm:$0xff]
    %v315 = vld [vmem:[#allocation2 + $0x1d0] sm:$0xff]
    %v316 = vld [vmem:[#allocation2 + $0x1d8] sm:$0xff]
    %v317 = vld [vmem:[#allocation2 + $0x1e0] sm:$0xff]
    %v318 = vld [vmem:[#allocation2 + $0x1e8] sm:$0xff]
    %v319 = vld [vmem:[#allocation2 + $0x1f0] sm:$0xff]
    %v320 = vld [vmem:[#allocation2 + $0x1f8] sm:$0xff]
    %v321 = vld [vmem:[#allocation2 + $0x200] sm:$0xff]
    %v322 = vld [vmem:[#allocation2 + $0x208] sm:$0xff]
    %v323 = vld [vmem:[#allocation2 + $0x210] sm:$0xff]
    %v324 = vld [vmem:[#allocation2 + $0x218] sm:$0xff]
    %v325 = vld [vmem:[#allocation2 + $0x220] sm:$0xff]
    %v326 = vld [vmem:[#allocation2 + $0x228] sm:$0xff]
    %v327 = vld [vmem:[#allocation2 + $0x230] sm:$0xff]
    %v328 = vld [vmem:[#allocation2 + $0x238] sm:$0xff]
    %v329 = vld [vmem:[#allocation2 + $0x240] sm:$0xff]
    %v330 = vld [vmem:[#allocation2 + $0x248] sm:$0xff]
    %v331 = vld [vmem:[#allocation2 + $0x250] sm:$0xff]
    %v332 = vld [vmem:[#allocation2 + $0x258] sm:$0xff]
    %v333 = vld [vmem:[#allocation2 + $0x260] sm:$0xff]
    %v334 = vld [vmem:[#allocation2 + $0x268] sm:$0xff]
    %v335 = vld [vmem:[#allocation2 + $0x270] sm:$0xff]
    %v336 = vld [vmem:[#allocation2 + $0x278] sm:$0xff]
    %v337 = vld [vmem:[#allocation2 + $0x280] sm:$0xff]
    %v338 = vld [vmem:[#allocation2 + $0x288] sm:$0xff]
    %v339 = vld [vmem:[#allocation2 + $0x290] sm:$0xff]
    %v340 = vld [vmem:[#allocation2 + $0x298] sm:$0xff]
    %v341 = vld [vmem:[#allocation2 + $0x2a0] sm:$0xff]
    %v342 = vld [vmem:[#allocation2 + $0x2a8] sm:$0xff]
    %v343 = vld [vmem:[#allocation2 + $0x2b0] sm:$0xff]
    %v344 = vld [vmem:[#allocation2 + $0x2b8] sm:$0xff]
    %v345 = vld [vmem:[#allocation2 + $0x2c0] sm:$0xff]
    %v346 = vld [vmem:[#allocation2 + $0x2c8] sm:$0xff]
    %v347 = vld [vmem:[#allocation2 + $0x2d0] sm:$0xff]
    %v348 = vld [vmem:[#allocation2 + $0x2d8] sm:$0xff]
    %v349 = vld [vmem:[#allocation2 + $0x2e0] sm:$0xff]
    %v350 = vld [vmem:[#allocation2 + $0x2e8] sm:$0xff]
    %v351 = vld [vmem:[#allocation2 + $0x2f0] sm:$0xff]
    %v352 = vld [vmem:[#allocation2 + $0x2f8] sm:$0xff]
    %v353 = vld [vmem:[%s5] sm:$0x3]
    %v355 = vlaneseq
    %v356 = vshrl.u32 %v355, 7
    %v357 = vsub.s32 0, %v356
    %v358 = vrot.slane %v353, %v357
    %v359 = vlaneseq
    %v360 = vshrl.u32 %v359, 7
    %v361 = vsub.s32 1, %v360
    %v362 = vrot.slane %v353, %v361
    %365 = vmatprep.subr.mxu0 %v258
    %366 = vmatpush1.msra.mxu0 %v257
    %367 = vmatprep.subr.mxu0 %v260
    %368 = vmatpush1.msra.mxu0 %v259
    %369 = vmatprep.subr.mxu0 %v262
    %370 = vmatpush1.msra.mxu0 %v261
    %371 = vmatprep.subr.mxu0 %v264
    %372 = vmatpush1.msra.mxu0 %v263
    %373 = vmatprep.subr.mxu0 %v266
    %374 = vmatpush1.msra.mxu0 %v265
    %375 = vmatprep.subr.mxu0 %v268
    %376 = vmatpush1.msra.mxu0 %v267
    %377 = vmatprep.subr.mxu0 %v270
    %378 = vmatpush1.msra.mxu0 %v269
    %379 = vmatprep.subr.mxu0 %v272
    %380 = vmatpush1.msra.mxu0 %v271
    %381 = vmatprep.subr.mxu0 %v274
    %382 = vmatpush1.msra.mxu0 %v273
    %383 = vmatprep.subr.mxu0 %v276
    %384 = vmatpush1.msra.mxu0 %v275
    %385 = vmatprep.subr.mxu0 %v278
    %386 = vmatpush1.msra.mxu0 %v277
    %387 = vmatprep.subr.mxu0 %v280
    %388 = vmatpush1.msra.mxu0 %v279
    %389 = vmatprep.subr.mxu0 %v282
    %390 = vmatpush1.msra.mxu0 %v281
    %391 = vmatprep.subr.mxu0 %v284
    %392 = vmatpush1.msra.mxu0 %v283
    %393 = vmatprep.subr.mxu0 %v286
    %394 = vmatpush1.msra.mxu0 %v285
    %395 = vmatprep.subr.mxu0 %v288
    %396 = vmatpush1.msra.mxu0 %v287
    %397 = vmatprep.subr.mxu0 %v290
    %398 = vmatpush1.msra.mxu0 %v289
    %399 = vmatprep.subr.mxu0 %v292
    %400 = vmatpush1.msra.mxu0 %v291
    %401 = vmatprep.subr.mxu0 %v294
    %402 = vmatpush1.msra.mxu0 %v293
    %403 = vmatprep.subr.mxu0 %v296
    %404 = vmatpush1.msra.mxu0 %v295
    %405 = vmatprep.subr.mxu0 %v298
    %406 = vmatpush1.msra.mxu0 %v297
    %407 = vmatprep.subr.mxu0 %v300
    %408 = vmatpush1.msra.mxu0 %v299
    %409 = vmatprep.subr.mxu0 %v302
    %410 = vmatpush1.msra.mxu0 %v301
    %411 = vmatprep.subr.mxu0 %v304
    %412 = vmatpush1.msra.mxu0 %v303
    %413 = vmatprep.subr.mxu0 %v306
    %414 = vmatpush1.msra.mxu0 %v305
    %415 = vmatprep.subr.mxu0 %v308
    %416 = vmatpush1.msra.mxu0 %v307
    %417 = vmatprep.subr.mxu0 %v310
    %418 = vmatpush1.msra.mxu0 %v309
    %419 = vmatprep.subr.mxu0 %v312
    %420 = vmatpush1.msra.mxu0 %v311
    %421 = vmatprep.subr.mxu0 %v314
    %422 = vmatpush1.msra.mxu0 %v313
    %423 = vmatprep.subr.mxu0 %v316
    %424 = vmatpush1.msra.mxu0 %v315
    %425 = vmatprep.subr.mxu0 %v318
    %426 = vmatpush1.msra.mxu0 %v317
    %427 = vmatprep.subr.mxu0 %v320
    %428 = vmatpush1.msra.mxu0 %v319
    %429 = vmatprep.mubr.f32.mxu0 %v255
    %430 = vmatmul.mubr.f32.gmra.mrb[0].mxu0 %v254
    %v431 = vpop.f32.mrb[0].mxu0
    %v432 = vadd.f32 %v358, %v431
    %v433 = vpop.f32.mrb[0].mxu0
    %v434 = vadd.f32 %v362, %v433
    %435 = vdwg.mxu0
    %436 = vmatprep.subr.mxu0 %v322
    %437 = vmatpush1.msra.mxu0 %v321
    %438 = vmatprep.subr.mxu0 %v324
    %439 = vmatpush1.msra.mxu0 %v323
    %440 = vmatprep.subr.mxu0 %v326
    %441 = vmatpush1.msra.mxu0 %v325
    %442 = vmatprep.subr.mxu0 %v328
    %443 = vmatpush1.msra.mxu0 %v327
    %444 = vmatprep.subr.mxu0 %v330
    %445 = vmatpush1.msra.mxu0 %v329
    %446 = vmatprep.subr.mxu0 %v332
    %447 = vmatpush1.msra.mxu0 %v331
    %448 = vmatprep.subr.mxu0 %v334
    %449 = vmatpush1.msra.mxu0 %v333
    %450 = vmatprep.subr.mxu0 %v336
    %451 = vmatpush1.msra.mxu0 %v335
    %452 = vmatprep.subr.mxu0 %v338
    %453 = vmatpush1.msra.mxu0 %v337
    %454 = vmatprep.subr.mxu0 %v340
    %455 = vmatpush1.msra.mxu0 %v339
    %456 = vmatprep.subr.mxu0 %v342
    %457 = vmatpush1.msra.mxu0 %v341
    %458 = vmatprep.subr.mxu0 %v344
    %459 = vmatpush1.msra.mxu0 %v343
    %460 = vmatprep.subr.mxu0 %v346
    %461 = vmatpush1.msra.mxu0 %v345
    %462 = vmatprep.subr.mxu0 %v348
    %463 = vmatpush1.msra.mxu0 %v347
    %464 = vmatprep.subr.mxu0 %v350
    %465 = vmatpush1.msra.mxu0 %v349
    %466 = vmatprep.subr.mxu0 %v352
    %467 = vmatpush1.msra.mxu0 %v351
    %468 = vmatprep.subr.mxu0 0.0
    %469 = vmatpush1.msra.mxu0 0.0
    %470 = vmatprep.subr.mxu0 0.0
    %471 = vmatpush1.msra.mxu0 0.0
    %472 = vmatprep.subr.mxu0 0.0
    %473 = vmatpush1.msra.mxu0 0.0
    %474 = vmatprep.subr.mxu0 0.0
    %475 = vmatpush1.msra.mxu0 0.0
    %476 = vmatprep.subr.mxu0 0.0
    %477 = vmatpush1.msra.mxu0 0.0
    %478 = vmatprep.subr.mxu0 0.0
    %479 = vmatpush1.msra.mxu0 0.0
    %480 = vmatprep.subr.mxu0 0.0
    %481 = vmatpush1.msra.mxu0 0.0
    %482 = vmatprep.subr.mxu0 0.0
    %483 = vmatpush1.msra.mxu0 0.0
    %484 = vmatprep.subr.mxu0 0.0
    %485 = vmatpush1.msra.mxu0 0.0
    %486 = vmatprep.subr.mxu0 0.0
    %487 = vmatpush1.msra.mxu0 0.0
    %488 = vmatprep.subr.mxu0 0.0
    %489 = vmatpush1.msra.mxu0 0.0
    %490 = vmatprep.subr.mxu0 0.0
    %491 = vmatpush1.msra.mxu0 0.0
    %492 = vmatprep.subr.mxu0 0.0
    %493 = vmatpush1.msra.mxu0 0.0
    %494 = vmatprep.subr.mxu0 0.0
    %495 = vmatpush1.msra.mxu0 0.0
    %496 = vmatprep.subr.mxu0 0.0
    %497 = vmatpush1.msra.mxu0 0.0
    %498 = vmatprep.subr.mxu0 0.0
    %499 = vmatpush1.msra.mxu0 0.0
    %500 = vmatprep.mubr.f32.mxu0 0.0
    %501 = vmatmul.mubr.f32.gmra.mrb[0].mxu0 %v256
    %v502 = vpop.f32.mrb[0].mxu0
    %v503 = vadd.f32 %v432, %v502
    %v504 = vpop.f32.mrb[0].mxu0
    %v505 = vadd.f32 %v434, %v504
    %506 = vdwg.mxu0
    %v507 = vmul.f32 %v503, 0.5
    %v508 = vmul.f32 %v505, 0.5
    %v509 = vmul.f32 %v503, 0.70710677
    %v510 = vmul.f32 %v505, 0.70710677
    %v511 = verf.f32.pop %v509
    %v512 = verf.f32.pop %v510
    %v513 = vadd.f32 %v511, 1.0
    %v514 = vadd.f32 %v512, 1.0
    %v515 = vmul.f32 %v507, %v513
    %v516 = vmul.f32 %v508, %v514
    %v517 = vld [vmem:[%s6] sm:$0xff]
    %v518 = vld [vmem:[%s6 + $0x8] sm:$0xff]
    %v519 = vld [vmem:[%s6 + $0x10] sm:$0xff]
    %v520 = vld [vmem:[%s6 + $0x18] sm:$0xff]
    %v521 = vld [vmem:[%s6 + $0x20] sm:$0xff]
    %v522 = vld [vmem:[%s6 + $0x28] sm:$0xff]
    %v523 = vld [vmem:[%s6 + $0x30] sm:$0xff]
    %v524 = vld [vmem:[%s6 + $0x38] sm:$0xff]
    %v525 = vld [vmem:[%s6 + $0x40] sm:$0xff]
    %v526 = vld [vmem:[%s6 + $0x48] sm:$0xff]
    %v527 = vld [vmem:[%s6 + $0x50] sm:$0xff]
    %v528 = vld [vmem:[%s6 + $0x58] sm:$0xff]
    %v529 = vld [vmem:[%s6 + $0x60] sm:$0xff]
    %v530 = vld [vmem:[%s6 + $0x68] sm:$0xff]
    %v531 = vld [vmem:[%s6 + $0x70] sm:$0xff]
    %v532 = vld [vmem:[%s6 + $0x78] sm:$0xff]
    %v533 = vld [vmem:[%s6 + $0x80] sm:$0xff]
    %v534 = vld [vmem:[%s6 + $0x88] sm:$0xff]
    %v535 = vld [vmem:[%s6 + $0x90] sm:$0xff]
    %v536 = vld [vmem:[%s6 + $0x98] sm:$0xff]
    %v537 = vld [vmem:[%s6 + $0xa0] sm:$0xff]
    %v538 = vld [vmem:[%s6 + $0xa8] sm:$0xff]
    %v539 = vld [vmem:[%s6 + $0xb0] sm:$0xff]
    %v540 = vld [vmem:[%s6 + $0xb8] sm:$0xff]
    %v541 = vld [vmem:[%s6 + $0xc0] sm:$0xff]
    %v542 = vld [vmem:[%s6 + $0xc8] sm:$0xff]
    %v543 = vld [vmem:[%s6 + $0xd0] sm:$0xff]
    %v544 = vld [vmem:[%s6 + $0xd8] sm:$0xff]
    %v545 = vld [vmem:[%s6 + $0xe0] sm:$0xff]
    %v546 = vld [vmem:[%s6 + $0xe8] sm:$0xff]
    %v547 = vld [vmem:[%s6 + $0xf0] sm:$0xff]
    %v548 = vld [vmem:[%s6 + $0xf8] sm:$0xff]
    %v549 = vld [vmem:[%s7] sm:$0x1]
    %v551 = vlaneseq
    %v552 = vshrl.u32 %v551, 7
    %v553 = vsub.s32 0, %v552
    %v554 = vrot.slane %v549, %v553
    %556 = vmatprep.subr.mxu0 0.0
    %557 = vmatpush1.msra.mxu0 %v517
    %558 = vmatprep.subr.mxu0 0.0
    %559 = vmatpush1.msra.mxu0 %v518
    %560 = vmatprep.subr.mxu0 0.0
    %561 = vmatpush1.msra.mxu0 %v519
    %562 = vmatprep.subr.mxu0 0.0
    %563 = vmatpush1.msra.mxu0 %v520
    %564 = vmatprep.subr.mxu0 0.0
    %565 = vmatpush1.msra.mxu0 %v521
    %566 = vmatprep.subr.mxu0 0.0
    %567 = vmatpush1.msra.mxu0 %v522
    %568 = vmatprep.subr.mxu0 0.0
    %569 = vmatpush1.msra.mxu0 %v523
    %570 = vmatprep.subr.mxu0 0.0
    %571 = vmatpush1.msra.mxu0 %v524
    %572 = vmatprep.subr.mxu0 0.0
    %573 = vmatpush1.msra.mxu0 %v525
    %574 = vmatprep.subr.mxu0 0.0
    %575 = vmatpush1.msra.mxu0 %v526
    %576 = vmatprep.subr.mxu0 0.0
    %577 = vmatpush1.msra.mxu0 %v527
    %578 = vmatprep.subr.mxu0 0.0
    %579 = vmatpush1.msra.mxu0 %v528
    %580 = vmatprep.subr.mxu0 0.0
    %581 = vmatpush1.msra.mxu0 %v529
    %582 = vmatprep.subr.mxu0 0.0
    %583 = vmatpush1.msra.mxu0 %v530
    %584 = vmatprep.subr.mxu0 0.0
    %585 = vmatpush1.msra.mxu0 %v531
    %586 = vmatprep.subr.mxu0 0.0
    %587 = vmatpush1.msra.mxu0 %v532
    %588 = vmatprep.subr.mxu0 0.0
    %589 = vmatpush1.msra.mxu0 %v533
    %590 = vmatprep.subr.mxu0 0.0
    %591 = vmatpush1.msra.mxu0 %v534
    %592 = vmatprep.subr.mxu0 0.0
    %593 = vmatpush1.msra.mxu0 %v535
    %594 = vmatprep.subr.mxu0 0.0
    %595 = vmatpush1.msra.mxu0 %v536
    %596 = vmatprep.subr.mxu0 0.0
    %597 = vmatpush1.msra.mxu0 %v537
    %598 = vmatprep.subr.mxu0 0.0
    %599 = vmatpush1.msra.mxu0 %v538
    %600 = vmatprep.subr.mxu0 0.0
    %601 = vmatpush1.msra.mxu0 %v539
    %602 = vmatprep.subr.mxu0 0.0
    %603 = vmatpush1.msra.mxu0 %v540
    %604 = vmatprep.subr.mxu0 0.0
    %605 = vmatpush1.msra.mxu0 %v541
    %606 = vmatprep.subr.mxu0 0.0
    %607 = vmatpush1.msra.mxu0 %v542
    %608 = vmatprep.subr.mxu0 0.0
    %609 = vmatpush1.msra.mxu0 %v543
    %610 = vmatprep.subr.mxu0 0.0
    %611 = vmatpush1.msra.mxu0 %v544
    %612 = vmatprep.subr.mxu0 0.0
    %613 = vmatpush1.msra.mxu0 %v545
    %614 = vmatprep.subr.mxu0 0.0
    %615 = vmatpush1.msra.mxu0 %v546
    %616 = vmatprep.subr.mxu0 0.0
    %617 = vmatpush1.msra.mxu0 %v547
    %618 = vmatprep.subr.mxu0 0.0
    %619 = vmatpush1.msra.mxu0 %v548
    %620 = vmatprep.mubr.f32.mxu0 %v516
    %621 = vmatmul.mubr.f32.gmra.mrb[0].mxu0 %v515
    %v622 = vpop.f32.mrb[0].mxu0
    %v623 = vadd.f32 %v554, %v622
    %v624 = vpop.f32.mrb[0].mxu0
    %625 = vdwg.mxu0
    %v626 = vld [vmem:[%s1] sm:$0xff]
    %v627 = vld [vmem:[%s8] sm:$0xf]
    %v628 = vld [vmem:[%s9] sm:$0x1]
    %v630 = vlaneseq
    %v631 = vshrl.u32 %v630, 7
    %v632 = vsub.s32 0, %v631
    %v633 = vrot.slane %v628, %v632
    %vm635 = vcmask 31744
    %v637 = vsel %vm635, %v626, 0
    %vm639 = vcmask 1043456
    %v641 = vsel %vm639, %v627, 0
    %643 = vmatprep.subr.mxu0 0.0
    %644 = vmatpush1.msra.mxu0 %v641
    %645 = vmatprep.subr.mxu0 0.0
    %646 = vmatpush1.msra.mxu0 0.0
    %647 = vmatprep.subr.mxu0 0.0
    %648 = vmatpush1.msra.mxu0 0.0
    %649 = vmatprep.subr.mxu0 0.0
    %650 = vmatpush1.msra.mxu0 0.0
    %651 = vmatprep.subr.mxu0 0.0
    %652 = vmatpush1.msra.mxu0 0.0
    %653 = vmatprep.subr.mxu0 0.0
    %654 = vmatpush1.msra.mxu0 0.0
    %655 = vmatprep.subr.mxu0 0.0
    %656 = vmatpush1.msra.mxu0 0.0
    %657 = vmatprep.subr.mxu0 0.0
    %658 = vmatpush1.msra.mxu0 0.0
    %659 = vmatprep.subr.mxu0 0.0
    %660 = vmatpush1.msra.mxu0 0.0
    %661 = vmatprep.subr.mxu0 0.0
    %662 = vmatpush1.msra.mxu0 0.0
    %663 = vmatprep.subr.mxu0 0.0
    %664 = vmatpush1.msra.mxu0 0.0
    %665 = vmatprep.subr.mxu0 0.0
    %666 = vmatpush1.msra.mxu0 0.0
    %667 = vmatprep.subr.mxu0 0.0
    %668 = vmatpush1.msra.mxu0 0.0
    %669 = vmatprep.subr.mxu0 0.0
    %670 = vmatpush1.msra.mxu0 0.0
    %671 = vmatprep.subr.mxu0 0.0
    %672 = vmatpush1.msra.mxu0 0.0
    %673 = vmatprep.subr.mxu0 0.0
    %674 = vmatpush1.msra.mxu0 0.0
    %675 = vmatprep.subr.mxu0 0.0
    %676 = vmatpush1.msra.mxu0 0.0
    %677 = vmatprep.subr.mxu0 0.0
    %678 = vmatpush1.msra.mxu0 0.0
    %679 = vmatprep.subr.mxu0 0.0
    %680 = vmatpush1.msra.mxu0 0.0
    %681 = vmatprep.subr.mxu0 0.0
    %682 = vmatpush1.msra.mxu0 0.0
    %683 = vmatprep.subr.mxu0 0.0
    %684 = vmatpush1.msra.mxu0 0.0
    %685 = vmatprep.subr.mxu0 0.0
    %686 = vmatpush1.msra.mxu0 0.0
    %687 = vmatprep.subr.mxu0 0.0
    %688 = vmatpush1.msra.mxu0 0.0
    %689 = vmatprep.subr.mxu0 0.0
    %690 = vmatpush1.msra.mxu0 0.0
    %691 = vmatprep.subr.mxu0 0.0
    %692 = vmatpush1.msra.mxu0 0.0
    %693 = vmatprep.subr.mxu0 0.0
    %694 = vmatpush1.msra.mxu0 0.0
    %695 = vmatprep.subr.mxu0 0.0
    %696 = vmatpush1.msra.mxu0 0.0
    %697 = vmatprep.subr.mxu0 0.0
    %698 = vmatpush1.msra.mxu0 0.0
    %699 = vmatprep.subr.mxu0 0.0
    %700 = vmatpush1.msra.mxu0 0.0
    %701 = vmatprep.subr.mxu0 0.0
    %702 = vmatpush1.msra.mxu0 0.0
    %703 = vmatprep.subr.mxu0 0.0
    %704 = vmatpush1.msra.mxu0 0.0
    %705 = vmatprep.subr.mxu0 0.0
    %706 = vmatpush1.msra.mxu0 0.0
    %707 = vmatprep.mubr.f32.mxu0 0.0
    %708 = vmatmul.mubr.f32.gmra.mrb[0].mxu0 %v637
    %v709 = vpop.f32.mrb[0].mxu0
    %v710 = vadd.f32 %v633, %v709
    %v711 = vpop.f32.mrb[0].mxu0
    %712 = vdwg.mxu0
    %v713 = vmul.f32 %v623, %v710
    %v714 = vmul.f32 %v713, 0.5
    %v715 = vmul.f32 %v713, 0.70710677
    %v716 = verf.f32.pop %v715
    %v717 = vadd.f32 %v716, 1.0
    %v718 = vmul.f32 %v714, %v717
    %v719 = vld [vmem:[%s10] sm:$0xff]
    %v720 = vld [vmem:[%s10 + $0x8] sm:$0xff]
    %v721 = vld [vmem:[%s10 + $0x10] sm:$0xff]
    %v722 = vld [vmem:[%s10 + $0x18] sm:$0xff]
    %v723 = vld [vmem:[%s11] sm:$0x1]
    %v725 = vlaneseq
    %v726 = vshrl.u32 %v725, 7
    %v727 = vsub.s32 0, %v726
    %v728 = vrot.slane %v723, %v727
    %vm730 = vcmask 261120
    %v732 = vsel %vm730, %v718, 0
    %734 = vmatprep.subr.mxu0 0.0
    %735 = vmatpush1.msra.mxu0 %v719
    %736 = vmatprep.subr.mxu0 0.0
    %737 = vmatpush1.msra.mxu0 %v720
    %738 = vmatprep.subr.mxu0 0.0
    %739 = vmatpush1.msra.mxu0 %v721
    %740 = vmatprep.subr.mxu0 0.0
    %741 = vmatpush1.msra.mxu0 %v722
    %742 = vmatprep.subr.mxu0 0.0
    %743 = vmatpush1.msra.mxu0 0.0
    %744 = vmatprep.subr.mxu0 0.0
    %745 = vmatpush1.msra.mxu0 0.0
    %746 = vmatprep.subr.mxu0 0.0
    %747 = vmatpush1.msra.mxu0 0.0
    %748 = vmatprep.subr.mxu0 0.0
    %749 = vmatpush1.msra.mxu0 0.0
    %750 = vmatprep.subr.mxu0 0.0
    %751 = vmatpush1.msra.mxu0 0.0
    %752 = vmatprep.subr.mxu0 0.0
    %753 = vmatpush1.msra.mxu0 0.0
    %754 = vmatprep.subr.mxu0 0.0
    %755 = vmatpush1.msra.mxu0 0.0
    %756 = vmatprep.subr.mxu0 0.0
    %757 = vmatpush1.msra.mxu0 0.0
    %758 = vmatprep.subr.mxu0 0.0
    %759 = vmatpush1.msra.mxu0 0.0
    %760 = vmatprep.subr.mxu0 0.0
    %761 = vmatpush1.msra.mxu0 0.0
    %762 = vmatprep.subr.mxu0 0.0
    %763 = vmatpush1.msra.mxu0 0.0
    %764 = vmatprep.subr.mxu0 0.0
    %765 = vmatpush1.msra.mxu0 0.0
    %766 = vmatprep.subr.mxu0 0.0
    %767 = vmatpush1.msra.mxu0 0.0
    %768 = vmatprep.subr.mxu0 0.0
    %769 = vmatpush1.msra.mxu0 0.0
    %770 = vmatprep.subr.mxu0 0.0
    %771 = vmatpush1.msra.mxu0 0.0
    %772 = vmatprep.subr.mxu0 0.0
    %773 = vmatpush1.msra.mxu0 0.0
    %774 = vmatprep.subr.mxu0 0.0
    %775 = vmatpush1.msra.mxu0 0.0
    %776 = vmatprep.subr.mxu0 0.0
    %777 = vmatpush1.msra.mxu0 0.0
    %778 = vmatprep.subr.mxu0 0.0
    %779 = vmatpush1.msra.mxu0 0.0
    %780 = vmatprep.subr.mxu0 0.0
    %781 = vmatpush1.msra.mxu0 0.0
    %782 = vmatprep.subr.mxu0 0.0
    %783 = vmatpush1.msra.mxu0 0.0
    %784 = vmatprep.subr.mxu0 0.0
    %785 = vmatpush1.msra.mxu0 0.0
    %786 = vmatprep.subr.mxu0 0.0
    %787 = vmatpush1.msra.mxu0 0.0
    %788 = vmatprep.subr.mxu0 0.0
    %789 = vmatpush1.msra.mxu0 0.0
    %790 = vmatprep.subr.mxu0 0.0
    %791 = vmatpush1.msra.mxu0 0.0
    %792 = vmatprep.subr.mxu0 0.0
    %793 = vmatpush1.msra.mxu0 0.0
    %794 = vmatprep.subr.mxu0 0.0
    %795 = vmatpush1.msra.mxu0 0.0
    %796 = vmatprep.subr.mxu0 0.0
    %797 = vmatpush1.msra.mxu0 0.0
    %798 = vmatprep.mubr.f32.mxu0 0.0
    %799 = vmatmul.mubr.f32.gmra.mrb[0].mxu0 %v732
    %v800 = vpop.f32.mrb[0].mxu0
    %v801 = vadd.f32 %v728, %v800
    %v802 = vpop.f32.mrb[0].mxu0
    %803 = vdwg.mxu0
    %805 = vrot.lane.b32.xlu0 %v801, 4
    %v806 = vpop.permute.xlu0 %805
    %vm808 = vcmp.gt.f32.partialorder %v801, %v806
    %v809 = vsel %vm808, 1, 0
    %810 = vrot.lane.b32.xlu0 %v801, 124
    %v811 = vpop.permute.xlu0 %810
    %v813 = vmax.f32 %v801, %v811
    %815 = vrot.lane.b32.xlu0 %v813, 8
    %v816 = vpop.permute.xlu0 %815
    %vm818 = vcmp.gt.f32.partialorder %v801, %v816
    %819 = vrot.lane.b32.xlu0 %v809, 4
    %v820 = vpop.permute.xlu0 %819
    %v821 = vsel %vm818, 2, %v820
    %822 = vrot.lane.b32.xlu0 %v821, 120
    %v823 = vpop.permute.xlu0 %822
    %824 = vst.msk [vmem:[%s12] sm:$0xff] %vm635, %v823
    // Predicated region
    $region54: #{tpu_custom_call.1} parent=1 // pred_check
      _
    $region55: #{tpu_custom_call.1} parent=1 // pred_check_branch
      %826 = sbr.rel (0) target = $region57
    $region56: #{tpu_custom_call.1} parent=1 // pred_region
      _
    $region57: #{tpu_custom_call.1} parent=1 // pred_fallthru
      _
    // Predicated region
    $region58: #{tpu_custom_call.1} parent=1 // pred_check
      _
    $region59: #{tpu_custom_call.1} parent=1 // pred_check_branch
      %828 = sbr.rel (0) target = $region61
    $region60: #{tpu_custom_call.1} parent=1 // pred_region
      _
    $region61: #{tpu_custom_call.1} parent=1 // pred_fallthru
      _
    %829 = vsyncpa [#allocation3], 1

</llo_original>
